<compile_context>
chip_gen: v6e
topology: v6e:2x2x1
jax: 0.10.0
libtpu: 0.0.40
codegen_flags: <defaults>
</compile_context>

<pallas_src>
import functools
import math

import jax
import jax.numpy as jnp
from jax.experimental import pallas as pl
from jax.experimental.pallas import tpu as pltpu


def _gelu_tanh(x):
    # F.gelu(x, approximate='tanh')
    c = math.sqrt(2.0 / math.pi)
    return 0.5 * x * (1.0 + jnp.tanh(c * (x + 0.044715 * x * x * x)))


def _round_up(a, b):
    return ((a + b - 1) // b) * b


def _sublane_pack(dtype):
    # min second-to-last tile: 8 (4B), 16 (2B), 32 (1B)
    return max(8, 32 // jnp.dtype(dtype).itemsize)


def _device_config():
    kind = ""
    try:
        kind = jax.devices()[0].device_kind.lower()
    except Exception:
        pass
    if "v5 lite" in kind or "v5e" in kind or "v5lite" in kind:
        # v5e: ~197 TF/s vs ~0.82 TB/s -> tm=256 is already past the roofline
        # crossover; 16 MiB scoped-VMEM default, so raise the limit explicitly.
        return dict(tm=256, th=512, vmem_budget=24 << 20,
                    vmem_limit=64 << 20, two_tc=False)
    if "v7" in kind:
        # v7x: 996 TF/s vs ~1.6 TB/s per TC, but only 64 MiB VMEM and 2 TCs.
        return dict(tm=640, th=1024, vmem_budget=24 << 20,
                    vmem_limit=48 << 20, two_tc=True)
    # v6e-class default: big row tile for weight reuse (needs ~712 flops/byte).
    return dict(tm=768, th=1024, vmem_budget=30 << 20,
                vmem_limit=64 << 20, two_tc=False)


def _vmem_fast(tm, d, h, xbytes, wbytes):
    # Resident-weight path: weights/bias (double-buffered allocation), x/out
    # (double-buffered), plus f32 intermediates.
    wts = 2 * (d * h + h * d + h + d) * wbytes
    io = 2 * tm * d * xbytes * 2
    tmp = tm * h * 4 + tm * d * 4
    return wts + io + tmp


def _vmem_ktiled(tm, th, d, xbytes, wbytes):
    wts = 2 * (d * th + th * d + th + d) * wbytes
    io = 2 * tm * d * xbytes * 2
    acc = tm * d * 4
    tmp = tm * th * 4
    return wts + io + acc + tmp


# --------------------------- kernels ---------------------------------------


def _mlp_kernel_resident(x_ref, w1_ref, b1_ref, w2_ref, b2_ref, o_ref, *,
                         act_dtype):
    # Grid: (i over row tiles). Weights/biases are grid-invariant (resident).
    h = jnp.dot(x_ref[...], w1_ref[...], preferred_element_type=jnp.float32)
    h = h + b1_ref[...].astype(jnp.float32)
    h = _gelu_tanh(h.astype(act_dtype))
    y = jnp.dot(h.astype(w2_ref.dtype), w2_ref[...],
                preferred_element_type=jnp.float32)
    o_ref[...] = (y + b2_ref[...].astype(jnp.float32)).astype(o_ref.dtype)


def _mlp_kernel_ktiled(x_ref, w1_ref, b1_ref, w2_ref, b2_ref, o_ref, acc_ref,
                       *, act_dtype):
    # Grid: (i over row tiles [parallel], k over hidden chunks [arbitrary]).
    k = pl.program_id(1)

    @pl.when(k == 0)
    def _():
        acc_ref[...] = jnp.zeros_like(acc_ref)

    h = jnp.dot(x_ref[...], w1_ref[...], preferred_element_type=jnp.float32)
    h = h + b1_ref[...].astype(jnp.float32)
    h = _gelu_tanh(h.astype(act_dtype))
    acc_ref[...] += jnp.dot(h.astype(w2_ref.dtype), w2_ref[...],
                            preferred_element_type=jnp.float32)

    @pl.when(k == pl.num_programs(1) - 1)
    def _():
        o_ref[...] = (acc_ref[...] + b2_ref[...].astype(jnp.float32)
                      ).astype(o_ref.dtype)


# --------------------------- wrapper ----------------------------------------


def mlp_pallas(x2d, w1, b1, w2, b2, *, tm=None, th=None):
    """x2d: (M, D), w1: (D, H), b1: (H,), w2: (H, D), b2: (D,) -> (M, D)."""
    M, D = x2d.shape
    Dw, H = w1.shape
    assert Dw == D and w2.shape == (H, D) and b1.shape == (H,) and b2.shape == (D,)

    cfg = _device_config()
    tm = cfg["tm"] if tm is None else tm
    th = cfg["th"] if th is None else th
    budget = cfg["vmem_budget"]

    xbytes = jnp.dtype(x2d.dtype).itemsize
    wbytes = jnp.dtype(w1.dtype).itemsize
    pack = max(_sublane_pack(x2d.dtype), _sublane_pack(w1.dtype))

    # Feature dim stays lane-aligned; this is a no-op for normal ViT dims.
    D_pad = _round_up(D, 128)

    # GELU compute dtype: bf16 only for bf16 models (bf16 VPU/EUP on v6e/v7x);
    # f32 otherwise (exact for f32 models, no bf16 penalty on v5e).
    act_dtype = jnp.bfloat16 if x2d.dtype == jnp.bfloat16 else jnp.float32

    # ---- choose between the resident-weight fast path and the k-tiled path --
    tm_eff = _round_up(min(tm, _round_up(M, pack)), pack)
    H_pad_fast = _round_up(H, 128)

    tm_fast = tm_eff
    while (_vmem_fast(tm_fast, D_pad, H_pad_fast, xbytes, wbytes) > budget
           and tm_fast > pack):
        tm_fast = max(pack, _round_up(tm_fast // 2, pack))
    fast_floor = min(256, _round_up(M, pack))
    use_fast = (_vmem_fast(tm_fast, D_pad, H_pad_fast, xbytes, wbytes) <= budget
                and tm_fast >= fast_floor)

    if use_fast:
        tm_eff = tm_fast
        H_pad = H_pad_fast
        th_eff = H_pad
    else:
        th_eff = min(th, _round_up(H, 128))
        while (_vmem_ktiled(tm_eff, th_eff, D_pad, xbytes, wbytes) > budget
               and tm_eff > pack):
            tm_eff = max(pack, _round_up(tm_eff // 2, pack))
        while (_vmem_ktiled(tm_eff, th_eff, D_pad, xbytes, wbytes) > budget
               and th_eff > 128):
            th_eff = max(128, _round_up(th_eff // 2, 128))
        H_pad = _round_up(H, th_eff)

    grid_m = pl.cdiv(M, tm_eff)
    # v7x has 2 TensorCores/chip: make sure the parallel axis has >= 2 tiles.
    if cfg["two_tc"] and grid_m < 2 and M > pack:
        tm_eff = max(pack, _round_up(pl.cdiv(M, 2), pack))
        grid_m = pl.cdiv(M, tm_eff)

    # --- padding (weights only, and only when D/H are not already aligned) ---
    needs_d_pad = D_pad != D
    needs_h_pad = H_pad != H

    xp = jnp.pad(x2d, ((0, 0), (0, D_pad - D))) if needs_d_pad else x2d
    w1p, b1p, w2p, b2p = w1, b1, w2, b2
    if needs_d_pad:
        w1p = jnp.pad(w1p, ((0, D_pad - D), (0, 0)))
        w2p = jnp.pad(w2p, ((0, 0), (0, D_pad - D)))
        b2p = jnp.pad(b2p, (0, D_pad - D))
    if needs_h_pad:
        w1p = jnp.pad(w1p, ((0, 0), (0, H_pad - H)))
        w2p = jnp.pad(w2p, ((0, H_pad - H), (0, 0)))
        b1p = jnp.pad(b1p, (0, H_pad - H))
    b1p = b1p.reshape(1, H_pad)
    b2p = b2p.reshape(1, D_pad)

    # --- cost estimate (weights re-streamed once per row tile on k-path) ----
    w_bytes_total = (w1p.size + w2p.size + b1p.size + b2p.size) * wbytes
    weight_passes = 1 if use_fast else grid_m
    cost = pl.CostEstimate(
        flops=4 * M * D * H,
        transcendentals=M * H,
        bytes_accessed=2 * M * D_pad * xbytes + weight_passes * w_bytes_total,
    )

    compiler_params = pltpu.CompilerParams(
        dimension_semantics=("parallel",) if use_fast else ("parallel", "arbitrary"),
        vmem_limit_bytes=cfg["vmem_limit"],
    )

    if use_fast:
        kernel = functools.partial(_mlp_kernel_resident, act_dtype=act_dtype)
        grid_spec = pltpu.PrefetchScalarGridSpec(
            num_scalar_prefetch=0,
            grid=(grid_m,),
            in_specs=[
                pl.BlockSpec((tm_eff, D_pad), lambda i: (i, 0)),   # x row tile
                pl.BlockSpec((D_pad, H_pad), lambda i: (0, 0)),    # w1 (resident)
                pl.BlockSpec((1, H_pad), lambda i: (0, 0)),        # b1 (resident)
                pl.BlockSpec((H_pad, D_pad), lambda i: (0, 0)),    # w2 (resident)
                pl.BlockSpec((1, D_pad), lambda i: (0, 0)),        # b2 (resident)
            ],
            out_specs=pl.BlockSpec((tm_eff, D_pad), lambda i: (i, 0)),
            scratch_shapes=[],
        )
    else:
        kernel = functools.partial(_mlp_kernel_ktiled, act_dtype=act_dtype)
        grid_spec = pltpu.PrefetchScalarGridSpec(
            num_scalar_prefetch=0,
            grid=(grid_m, H_pad // th_eff),
            in_specs=[
                pl.BlockSpec((tm_eff, D_pad), lambda i, k: (i, 0)),  # x row tile
                pl.BlockSpec((D_pad, th_eff), lambda i, k: (0, k)),  # w1 H-chunk
                pl.BlockSpec((1, th_eff), lambda i, k: (0, k)),      # b1 H-chunk
                pl.BlockSpec((th_eff, D_pad), lambda i, k: (k, 0)),  # w2 H-chunk
                pl.BlockSpec((1, D_pad), lambda i, k: (0, 0)),       # b2
            ],
            out_specs=pl.BlockSpec((tm_eff, D_pad), lambda i, k: (i, 0)),
            scratch_shapes=[pltpu.VMEM((tm_eff, D_pad), jnp.float32)],
        )

    out = pl.pallas_call(
        kernel,
        out_shape=jax.ShapeDtypeStruct((M, D_pad), x2d.dtype),
        grid_spec=grid_spec,
        compiler_params=compiler_params,
        cost_estimate=cost,
    )(xp, w1p, b1p, w2p, b2p)

    return out[:, :D] if needs_d_pad else out


def mlp_forward(x, w1, b1, w2, b2):
    """x: (B, S, D) -> (B, S, D); matches Mlp.forward (drop=0.0)."""
    B, S, D = x.shape
    y2d = mlp_pallas(x.reshape(B * S, D), w1, b1, w2, b2)
    return y2d.reshape(B, S, D)


def mlp_reference(x, w1, b1, w2, b2):
    h = jnp.einsum("bsd,dh->bsh", x, w1) + b1
    h = _gelu_tanh(h)
    return jnp.einsum("bsh,hd->bsd", h, w2) + b2


if __name__ == "__main__":
    # Small shapes consistent with the module: dim=32, hidden=dim*4=128.
    B, S, D = 2, 8, 32
    H = D * 4

    key = jax.random.PRNGKey(0)
    kx, k1, kb1, k2, kb2 = jax.random.split(key, 5)

    x = jax.random.normal(kx, (B, S, D), dtype=jnp.float32)

    # Deterministic parameter init; weights stored as (in_features, out_features).
    bound1 = 1.0 / math.sqrt(D)
    bound2 = 1.0 / math.sqrt(H)
    w1 = jax.random.uniform(k1, (D, H), jnp.float32, -bound1, bound1)
    b1 = jax.random.uniform(kb1, (H,), jnp.float32, -bound1, bound1)
    w2 = jax.random.uniform(k2, (H, D), jnp.float32, -bound2, bound2)
    b2 = jax.random.uniform(kb2, (D,), jnp.float32, -bound2, bound2)

    y = mlp_forward(x, w1, b1, w2, b2)
    y = jax.block_until_ready(y)

    y_ref = mlp_reference(x, w1, b1, w2, b2)
    assert y.shape == (B, S, D)
    assert jnp.allclose(y, y_ref, atol=1e-3, rtol=1e-3), "mismatch vs reference"

    # TODO(synk): nn.Dropout(p=0.0) is the identity at inference and is omitted.
    print("KERNEL_OK")
</pallas_src>

<mosaic_0001>
module attributes {stable_mosaic.version = 11 : i64} {
  func.func @_mlp_kernel_resident(%arg0: i32, %arg1: memref<16x128xf32, #tpu.memory_space<vmem>>, %arg2: memref<128x128xf32, #tpu.memory_space<vmem>>, %arg3: memref<1x128xf32, #tpu.memory_space<vmem>>, %arg4: memref<128x128xf32, #tpu.memory_space<vmem>>, %arg5: memref<1x128xf32, #tpu.memory_space<vmem>>, %arg6: memref<16x128xf32, #tpu.memory_space<vmem>>) attributes {dimension_semantics = [#tpu.dimension_semantics<parallel>], iteration_bounds = array<i64: 1>, scalar_prefetch = 0 : i64, scratch_operands = 0 : i64, tpu.core_type = #tpu.core_type<tc>, window_params = [{transform_indices = @transform_0, window_bounds = array<i64: 16, 128>}, {pipeline_mode = #tpu.pipeline_mode<synchronous>, transform_indices = @transform_1, window_bounds = array<i64: 128, 128>}, {pipeline_mode = #tpu.pipeline_mode<synchronous>, transform_indices = @transform_2, window_bounds = array<i64: 1, 128>}, {pipeline_mode = #tpu.pipeline_mode<synchronous>, transform_indices = @transform_3, window_bounds = array<i64: 128, 128>}, {pipeline_mode = #tpu.pipeline_mode<synchronous>, transform_indices = @transform_4, window_bounds = array<i64: 1, 128>}, {transform_indices = @transform_5, window_bounds = array<i64: 16, 128>}]} {
    %c0 = arith.constant 0 : index
    %c0_0 = arith.constant 0 : index
    %0 = vector.load %arg1[%c0, %c0_0] : memref<16x128xf32, #tpu.memory_space<vmem>>, vector<16x128xf32>
    %c0_1 = arith.constant 0 : index
    %c0_2 = arith.constant 0 : index
    %1 = vector.load %arg2[%c0_1, %c0_2] : memref<128x128xf32, #tpu.memory_space<vmem>>, vector<128x128xf32>
    %cst = arith.constant dense<0.000000e+00> : vector<16x128xf32>
    %2 = tpu.matmul %0, %1, %cst {dimension_numbers = #tpu.dot_dimension_numbers<[1], [0], [0], [1], [0, 0, 1, 1], [], []>} : vector<16x128xf32>, vector<128x128xf32>, vector<16x128xf32> -> vector<16x128xf32>
    %c0_3 = arith.constant 0 : index
    %c0_4 = arith.constant 0 : index
    %3 = vector.load %arg3[%c0_3, %c0_4] : memref<1x128xf32, #tpu.memory_space<vmem>>, vector<1x128xf32>
    %4 = vector.broadcast %3 : vector<1x128xf32> to vector<16x128xf32>
    %5 = arith.addf %2, %4 : vector<16x128xf32>
    %cst_5 = arith.constant 5.000000e-01 : f32
    %6 = vector.broadcast %cst_5 : f32 to vector<16x128xf32>
    %7 = arith.mulf %6, %5 : vector<16x128xf32>
    %cst_6 = arith.constant 4.471500e-02 : f32
    %8 = vector.broadcast %cst_6 : f32 to vector<16x128xf32>
    %9 = arith.mulf %8, %5 : vector<16x128xf32>
    %10 = arith.mulf %9, %5 : vector<16x128xf32>
    %11 = arith.mulf %10, %5 : vector<16x128xf32>
    %12 = arith.addf %5, %11 : vector<16x128xf32>
    %cst_7 = arith.constant 0.797884583 : f32
    %13 = vector.broadcast %cst_7 : f32 to vector<16x128xf32>
    %14 = arith.mulf %13, %12 : vector<16x128xf32>
    %15 = math.tanh %14 : vector<16x128xf32>
    %cst_8 = arith.constant 1.000000e+00 : f32
    %16 = vector.broadcast %cst_8 : f32 to vector<16x128xf32>
    %17 = arith.addf %16, %15 : vector<16x128xf32>
    %18 = arith.mulf %7, %17 : vector<16x128xf32>
    %c0_9 = arith.constant 0 : index
    %c0_10 = arith.constant 0 : index
    %19 = vector.load %arg4[%c0_9, %c0_10] : memref<128x128xf32, #tpu.memory_space<vmem>>, vector<128x128xf32>
    %cst_11 = arith.constant dense<0.000000e+00> : vector<16x128xf32>
    %20 = tpu.matmul %18, %19, %cst_11 {dimension_numbers = #tpu.dot_dimension_numbers<[1], [0], [0], [1], [0, 0, 1, 1], [], []>} : vector<16x128xf32>, vector<128x128xf32>, vector<16x128xf32> -> vector<16x128xf32>
    %c0_12 = arith.constant 0 : index
    %c0_13 = arith.constant 0 : index
    %21 = vector.load %arg5[%c0_12, %c0_13] : memref<1x128xf32, #tpu.memory_space<vmem>>, vector<1x128xf32>
    %22 = vector.broadcast %21 : vector<1x128xf32> to vector<16x128xf32>
    %23 = arith.addf %20, %22 : vector<16x128xf32>
    %c0_14 = arith.constant 0 : index
    %c0_15 = arith.constant 0 : index
    %24 = vector.load %arg6[%c0_14, %c0_15] : memref<16x128xf32, #tpu.memory_space<vmem>>, vector<16x128xf32>
    tpu.vector_store %arg6[%c0_14, %c0_15], %23 {strides = array<i32>} : memref<16x128xf32, #tpu.memory_space<vmem>>, vector<16x128xf32>,
    return
  }
  func.func @transform_0(%arg0: i32) -> (i32, i32) {
    %c0_i32 = arith.constant 0 : i32
    %c0_i32_0 = arith.constant 0 : i32
    return %arg0, %c0_i32 : i32, i32
  }
  func.func @transform_1(%arg0: i32) -> (i32, i32) {
    %c0_i32 = arith.constant 0 : i32
    %c0_i32_0 = arith.constant 0 : i32
    %c0_i32_1 = arith.constant 0 : i32
    return %c0_i32, %c0_i32_0 : i32, i32
  }
  func.func @transform_2(%arg0: i32) -> (i32, i32) {
    %c0_i32 = arith.constant 0 : i32
    %c0_i32_0 = arith.constant 0 : i32
    %c0_i32_1 = arith.constant 0 : i32
    return %c0_i32, %c0_i32_0 : i32, i32
  }
  func.func @transform_3(%arg0: i32) -> (i32, i32) {
    %c0_i32 = arith.constant 0 : i32
    %c0_i32_0 = arith.constant 0 : i32
    %c0_i32_1 = arith.constant 0 : i32
    return %c0_i32, %c0_i32_0 : i32, i32
  }
  func.func @transform_4(%arg0: i32) -> (i32, i32) {
    %c0_i32 = arith.constant 0 : i32
    %c0_i32_0 = arith.constant 0 : i32
    %c0_i32_1 = arith.constant 0 : i32
    return %c0_i32, %c0_i32_0 : i32, i32
  }
  func.func @transform_5(%arg0: i32) -> (i32, i32) {
    %c0_i32 = arith.constant 0 : i32
    %c0_i32_0 = arith.constant 0 : i32
    return %arg0, %c0_i32 : i32, i32
  }
}

</mosaic_0001>

<llo_original>
// kernel: tpu_custom_call.1
$region0: #{tpu_custom_call.1}
  #allocation0 [shape = 'u32[]', space=smem, size = 0x4, offset = 0x4, fixed_abs, tag = 'smem constant byte address 0x4 - core index']
  #allocation1 [shape = 'u32[144,128]{1,0:T(1,128)}', space=vmem, size = 0x12000, scoped, tag = 'internal scratch']
  %s0 = inlined_call_operand.hbm [shape: f32[16,128], index: 0, kind: input, shape index: {}]
  %s1 = inlined_call_operand.hbm [shape: f32[128,128], index: 1, kind: input, shape index: {}]
  %s2 = inlined_call_operand.vmem [shape: f32[1,128], index: 2, kind: input, shape index: {}]
  %s3 = inlined_call_operand.hbm [shape: f32[128,128], index: 3, kind: input, shape index: {}]
  %s4 = inlined_call_operand.vmem [shape: f32[1,128], index: 4, kind: input, shape index: {}]
  %s5 = inlined_call_operand.hbm [shape: f32[16,128], index: 5, kind: output, shape index: {}]
  %s6 = sld [smem:[#allocation0]]
  $region42: #{tpu_custom_call.1} parent=0
    _
  %s8 = ssub.s32 1, %s6
  %s9 = scalar_select 0, %s8, %s6
  $region1: #{tpu_custom_call.1} parent=0
    #allocation2 [shape = 'u8[8192]{0}', space=vmem, size = 0x2000, scoped, tag = 'input window, operand 0, single buffered']
    #allocation3 [shape = 's32[1]{0}', space=sflag, size = 0x4, scoped, tag = 'scoped memory for tpu_custom_call.1']
    #allocation4 [shape = 's32[1]{0}', space=sflag, size = 0x4, scoped, tag = 'scoped memory for tpu_custom_call.1']
    #allocation5 [shape = 'u8[65536]{0}', space=vmem, size = 0x10000, scoped, tag = 'input window, operand 1, single buffered']
    #allocation6 [shape = 's32[1]{0}', space=sflag, size = 0x4, scoped, tag = 'scoped memory for tpu_custom_call.1']
    #allocation7 [shape = 'u8[65536]{0}', space=vmem, size = 0x10000, scoped, tag = 'input window, operand 3, single buffered']
    #allocation8 [shape = 'u8[8192]{0}', space=vmem, size = 0x2000, scoped, tag = 'output window, operand 0, single buffered']
    %10 = vsyncpa [#allocation3], 0
    %11 = vsyncpa [#allocation6], 0
    %12 = vsyncpa [#allocation4], 0
    // Predicated region
    $region2: #{tpu_custom_call.1} parent=1 // pred_check
      _
    $region3: #{tpu_custom_call.1} parent=1 // pred_check_branch
      %14 = sbr.rel (0) target = $region5
    $region4: #{tpu_custom_call.1} parent=1 // pred_region
      %s16 = ssub.s32 256, 256
      %17 = vsyncadd [#allocation3], %s16
      %s18 = sshll.u32 [#allocation2], 4
      %s19 = int_to_ptr.vmem [resolvable:$true] %s18
      %24 = dma.hbm_to_vmem [thread:$0]  %s0, 256, %s19, [#allocation3], 128, 128, 8
    $region5: #{tpu_custom_call.1} parent=1 // pred_fallthru
      _
    // Predicated region
    $region6: #{tpu_custom_call.1} parent=1 // pred_check
      _
    $region7: #{tpu_custom_call.1} parent=1 // pred_check_branch
      %26 = sbr.rel (0) target = $region9
    $region8: #{tpu_custom_call.1} parent=1 // pred_region
      %s28 = ssub.s32 2048, 2048
      %29 = vsyncadd [#allocation6], %s28
      %s30 = sshll.u32 [#allocation5], 4
      %s31 = int_to_ptr.vmem [resolvable:$true] %s30
      %36 = dma.hbm_to_vmem [thread:$0]  %s1, 2048, %s31, [#allocation6], 128, 128, 8
    $region9: #{tpu_custom_call.1} parent=1 // pred_fallthru
      _
    // Predicated region
    $region10: #{tpu_custom_call.1} parent=1 // pred_check
      _
    $region11: #{tpu_custom_call.1} parent=1 // pred_check_branch
      %38 = sbr.rel (0) target = $region13
    $region12: #{tpu_custom_call.1} parent=1 // pred_region
      _
    $region13: #{tpu_custom_call.1} parent=1 // pred_fallthru
      _
    // Predicated region
    $region14: #{tpu_custom_call.1} parent=1 // pred_check
      _
    $region15: #{tpu_custom_call.1} parent=1 // pred_check_branch
      %40 = sbr.rel (0) target = $region17
    $region16: #{tpu_custom_call.1} parent=1 // pred_region
      %s42 = ssub.s32 2048, 2048
      %43 = vsyncadd [#allocation6], %s42
      %s44 = sshll.u32 [#allocation7], 4
      %s45 = int_to_ptr.vmem [resolvable:$true] %s44
      %50 = dma.hbm_to_vmem [thread:$0]  %s3, 2048, %s45, [#allocation6], 128, 128, 8
    $region17: #{tpu_custom_call.1} parent=1 // pred_fallthru
      _
    // Predicated region
    $region18: #{tpu_custom_call.1} parent=1 // pred_check
      _
    $region19: #{tpu_custom_call.1} parent=1 // pred_check_branch
      %52 = sbr.rel (0) target = $region21
    $region20: #{tpu_custom_call.1} parent=1 // pred_region
      _
    $region21: #{tpu_custom_call.1} parent=1 // pred_fallthru
      _
    // Predicated region
    $region22: #{tpu_custom_call.1} parent=1 // pred_check
      _
    $region23: #{tpu_custom_call.1} parent=1 // pred_check_branch
      %54 = sbr.rel (0) target = $region25
    $region24: #{tpu_custom_call.1} parent=1 // pred_region
      %55 = dma.done [#allocation3], 256
    $region25: #{tpu_custom_call.1} parent=1 // pred_fallthru
      _
    // Predicated region
    $region26: #{tpu_custom_call.1} parent=1 // pred_check
      _
    $region27: #{tpu_custom_call.1} parent=1 // pred_check_branch
      %57 = sbr.rel (0) target = $region29
    $region28: #{tpu_custom_call.1} parent=1 // pred_region
      %58 = dma.done [#allocation6], 2048
    $region29: #{tpu_custom_call.1} parent=1 // pred_fallthru
      _
    // Predicated region
    $region30: #{tpu_custom_call.1} parent=1 // pred_check
      _
    $region31: #{tpu_custom_call.1} parent=1 // pred_check_branch
      %60 = sbr.rel (0) target = $region33
    $region32: #{tpu_custom_call.1} parent=1 // pred_region
      %61 = dma.done [#allocation6], 2048
    $region33: #{tpu_custom_call.1} parent=1 // pred_fallthru
      _
    %v62 = vld [vmem:[#allocation2] sm:$0xff]
    %v63 = vld [vmem:[#allocation2 + $0x8] sm:$0xff]
    %v64 = vld [vmem:[#allocation5] sm:$0xff]
    %v65 = vld [vmem:[#allocation5 + $0x8] sm:$0xff]
    %v66 = vld [vmem:[#allocation5 + $0x10] sm:$0xff]
    %v67 = vld [vmem:[#allocation5 + $0x18] sm:$0xff]
    %v68 = vld [vmem:[#allocation5 + $0x20] sm:$0xff]
    %v69 = vld [vmem:[#allocation5 + $0x28] sm:$0xff]
    %v70 = vld [vmem:[#allocation5 + $0x30] sm:$0xff]
    %v71 = vld [vmem:[#allocation5 + $0x38] sm:$0xff]
    %v72 = vld [vmem:[#allocation5 + $0x40] sm:$0xff]
    %v73 = vld [vmem:[#allocation5 + $0x48] sm:$0xff]
    %v74 = vld [vmem:[#allocation5 + $0x50] sm:$0xff]
    %v75 = vld [vmem:[#allocation5 + $0x58] sm:$0xff]
    %v76 = vld [vmem:[#allocation5 + $0x60] sm:$0xff]
    %v77 = vld [vmem:[#allocation5 + $0x68] sm:$0xff]
    %v78 = vld [vmem:[#allocation5 + $0x70] sm:$0xff]
    %v79 = vld [vmem:[#allocation5 + $0x78] sm:$0xff]
    %v80 = vld [vmem:[%s2] sm:$0x1]
    %v82 = vlaneseq
    %v83 = vshrl.u32 %v82, 7
    %v84 = vsub.s32 0, %v83
    %v85 = vrot.slane %v80, %v84
    %87 = vmatprep.subr.mxu0 0.0
    %88 = vmatpush1.msra.mxu0 %v79
    %89 = vmatprep.subr.mxu0 0.0
    %90 = vmatpush1.msra.mxu0 %v78
    %91 = vmatprep.subr.mxu0 0.0
    %92 = vmatpush1.msra.mxu0 %v77
    %93 = vmatprep.subr.mxu0 0.0
    %94 = vmatpush1.msra.mxu0 %v76
    %95 = vmatprep.subr.mxu0 0.0
    %96 = vmatpush1.msra.mxu0 %v75
    %97 = vmatprep.subr.mxu0 0.0
    %98 = vmatpush1.msra.mxu0 %v74
    %99 = vmatprep.subr.mxu0 0.0
    %100 = vmatpush1.msra.mxu0 %v73
    %101 = vmatprep.subr.mxu0 0.0
    %102 = vmatpush1.msra.mxu0 %v72
    %103 = vmatprep.subr.mxu0 0.0
    %104 = vmatpush1.msra.mxu0 %v71
    %105 = vmatprep.subr.mxu0 0.0
    %106 = vmatpush1.msra.mxu0 %v70
    %107 = vmatprep.subr.mxu0 0.0
    %108 = vmatpush1.msra.mxu0 %v69
    %109 = vmatprep.subr.mxu0 0.0
    %110 = vmatpush1.msra.mxu0 %v68
    %111 = vmatprep.subr.mxu0 0.0
    %112 = vmatpush1.msra.mxu0 %v67
    %113 = vmatprep.subr.mxu0 0.0
    %114 = vmatpush1.msra.mxu0 %v66
    %115 = vmatprep.subr.mxu0 0.0
    %116 = vmatpush1.msra.mxu0 %v65
    %117 = vmatprep.subr.mxu0 0.0
    %118 = vmatpush1.msra.mxu0 %v64
    %119 = vmatprep.subr.mxu0 0.0
    %120 = vmatpush2.msra.mxu0 0.0
    %121 = vmatprep.subr.mxu0 0.0
    %122 = vmatpush2.msra.mxu0 0.0
    %123 = vmatprep.subr.mxu0 0.0
    %124 = vmatpush2.msra.mxu0 0.0
    %125 = vmatprep.subr.mxu0 0.0
    %126 = vmatpush2.msra.mxu0 0.0
    %127 = vmatprep.subr.mxu0 0.0
    %128 = vmatpush2.msra.mxu0 0.0
    %129 = vmatprep.subr.mxu0 0.0
    %130 = vmatpush2.msra.mxu0 0.0
    %131 = vmatprep.subr.mxu0 0.0
    %132 = vmatpush2.msra.mxu0 0.0
    %133 = vmatprep.subr.mxu0 0.0
    %134 = vmatpush2.msra.mxu0 0.0
    %135 = vmatprep.subr.mxu0 0.0
    %136 = vmatpush2.msra.mxu0 0.0
    %137 = vmatprep.subr.mxu0 0.0
    %138 = vmatpush2.msra.mxu0 0.0
    %139 = vmatprep.subr.mxu0 0.0
    %140 = vmatpush2.msra.mxu0 0.0
    %141 = vmatprep.subr.mxu0 0.0
    %142 = vmatpush2.msra.mxu0 0.0
    %143 = vmatprep.subr.mxu0 0.0
    %144 = vmatpush2.msra.mxu0 0.0
    %145 = vmatprep.subr.mxu0 0.0
    %146 = vmatpush2.msra.mxu0 0.0
    %147 = vmatprep.subr.mxu0 0.0
    %148 = vmatpush2.msra.mxu0 0.0
    %149 = vmatprep.subr.mxu0 0.0
    %150 = vmatpush2.msra.mxu0 0.0
    %151 = vmatprep.mubr.f32.mxu0 0.0
    %152 = vmatmul.mubr.f32.gmra.mxu0 %v62
    %v153 = vpop.f32.mrf.mxu0
    %v154 = vadd.f32 %v85, %v153
    %v155 = vpop.f32.mrf.mxu0
    %156 = vmatprep.mubr.f32.mxu0 0.0
    %157 = vmatmul.mubr.f32.gmra.mxu0 %v63
    %v158 = vpop.f32.mrf.mxu0
    %v159 = vadd.f32 %v85, %v158
    %v160 = vpop.f32.mrf.mxu0
    %161 = vdwg.mxu0
    %v162 = vmul.f32 %v154, 0.5
    %v163 = vmul.f32 %v159, 0.5
    %v164 = vmul.f32 %v154, 0.044715
    %v165 = vmul.f32 %v159, 0.044715
    %v166 = vmul.f32 %v164, %v154
    %v167 = vmul.f32 %v165, %v159
    %v168 = vmul.f32 %v166, %v154
    %v169 = vmul.f32 %v167, %v159
    %v170 = vadd.f32 %v154, %v168
    %v171 = vadd.f32 %v159, %v169
    %v172 = vmul.f32 %v170, 0.7978846
    %v173 = vmul.f32 %v171, 0.7978846
    %v174 = vtanh.pop %v172
    %v175 = vtanh.pop %v173
    %v176 = vadd.f32 %v174, 1.0
    %v177 = vadd.f32 %v175, 1.0
    %v178 = vmul.f32 %v162, %v176
    %v179 = vmul.f32 %v163, %v177
    %v180 = vld [vmem:[#allocation7] sm:$0xff]
    %v181 = vld [vmem:[#allocation7 + $0x8] sm:$0xff]
    %v182 = vld [vmem:[#allocation7 + $0x10] sm:$0xff]
    %v183 = vld [vmem:[#allocation7 + $0x18] sm:$0xff]
    %v184 = vld [vmem:[#allocation7 + $0x20] sm:$0xff]
    %v185 = vld [vmem:[#allocation7 + $0x28] sm:$0xff]
    %v186 = vld [vmem:[#allocation7 + $0x30] sm:$0xff]
    %v187 = vld [vmem:[#allocation7 + $0x38] sm:$0xff]
    %v188 = vld [vmem:[#allocation7 + $0x40] sm:$0xff]
    %v189 = vld [vmem:[#allocation7 + $0x48] sm:$0xff]
    %v190 = vld [vmem:[#allocation7 + $0x50] sm:$0xff]
    %v191 = vld [vmem:[#allocation7 + $0x58] sm:$0xff]
    %v192 = vld [vmem:[#allocation7 + $0x60] sm:$0xff]
    %v193 = vld [vmem:[#allocation7 + $0x68] sm:$0xff]
    %v194 = vld [vmem:[#allocation7 + $0x70] sm:$0xff]
    %v195 = vld [vmem:[#allocation7 + $0x78] sm:$0xff]
    %v196 = vld [vmem:[%s4] sm:$0x1]
    %v198 = vlaneseq
    %v199 = vshrl.u32 %v198, 7
    %v200 = vsub.s32 0, %v199
    %v201 = vrot.slane %v196, %v200
    %203 = vmatprep.subr.mxu0 0.0
    %204 = vmatpush1.msra.mxu0 %v195
    %205 = vmatprep.subr.mxu0 0.0
    %206 = vmatpush1.msra.mxu0 %v194
    %207 = vmatprep.subr.mxu0 0.0
    %208 = vmatpush1.msra.mxu0 %v193
    %209 = vmatprep.subr.mxu0 0.0
    %210 = vmatpush1.msra.mxu0 %v192
    %211 = vmatprep.subr.mxu0 0.0
    %212 = vmatpush1.msra.mxu0 %v191
    %213 = vmatprep.subr.mxu0 0.0
    %214 = vmatpush1.msra.mxu0 %v190
    %215 = vmatprep.subr.mxu0 0.0
    %216 = vmatpush1.msra.mxu0 %v189
    %217 = vmatprep.subr.mxu0 0.0
    %218 = vmatpush1.msra.mxu0 %v188
    %219 = vmatprep.subr.mxu0 0.0
    %220 = vmatpush1.msra.mxu0 %v187
    %221 = vmatprep.subr.mxu0 0.0
    %222 = vmatpush1.msra.mxu0 %v186
    %223 = vmatprep.subr.mxu0 0.0
    %224 = vmatpush1.msra.mxu0 %v185
    %225 = vmatprep.subr.mxu0 0.0
    %226 = vmatpush1.msra.mxu0 %v184
    %227 = vmatprep.subr.mxu0 0.0
    %228 = vmatpush1.msra.mxu0 %v183
    %229 = vmatprep.subr.mxu0 0.0
    %230 = vmatpush1.msra.mxu0 %v182
    %231 = vmatprep.subr.mxu0 0.0
    %232 = vmatpush1.msra.mxu0 %v181
    %233 = vmatprep.subr.mxu0 0.0
    %234 = vmatpush1.msra.mxu0 %v180
    %235 = vmatprep.subr.mxu0 0.0
    %236 = vmatpush2.msra.mxu0 0.0
    %237 = vmatprep.subr.mxu0 0.0
    %238 = vmatpush2.msra.mxu0 0.0
    %239 = vmatprep.subr.mxu0 0.0
    %240 = vmatpush2.msra.mxu0 0.0
    %241 = vmatprep.subr.mxu0 0.0
    %242 = vmatpush2.msra.mxu0 0.0
    %243 = vmatprep.subr.mxu0 0.0
    %244 = vmatpush2.msra.mxu0 0.0
    %245 = vmatprep.subr.mxu0 0.0
    %246 = vmatpush2.msra.mxu0 0.0
    %247 = vmatprep.subr.mxu0 0.0
    %248 = vmatpush2.msra.mxu0 0.0
    %249 = vmatprep.subr.mxu0 0.0
    %250 = vmatpush2.msra.mxu0 0.0
    %251 = vmatprep.subr.mxu0 0.0
    %252 = vmatpush2.msra.mxu0 0.0
    %253 = vmatprep.subr.mxu0 0.0
    %254 = vmatpush2.msra.mxu0 0.0
    %255 = vmatprep.subr.mxu0 0.0
    %256 = vmatpush2.msra.mxu0 0.0
    %257 = vmatprep.subr.mxu0 0.0
    %258 = vmatpush2.msra.mxu0 0.0
    %259 = vmatprep.subr.mxu0 0.0
    %260 = vmatpush2.msra.mxu0 0.0
    %261 = vmatprep.subr.mxu0 0.0
    %262 = vmatpush2.msra.mxu0 0.0
    %263 = vmatprep.subr.mxu0 0.0
    %264 = vmatpush2.msra.mxu0 0.0
    %265 = vmatprep.subr.mxu0 0.0
    %266 = vmatpush2.msra.mxu0 0.0
    %267 = vmatprep.mubr.f32.mxu0 0.0
    %268 = vmatmul.mubr.f32.gmra.mxu0 %v178
    %v269 = vpop.f32.mrf.mxu0
    %v270 = vadd.f32 %v201, %v269
    %v271 = vpop.f32.mrf.mxu0
    %272 = vmatprep.mubr.f32.mxu0 0.0
    %273 = vmatmul.mubr.f32.gmra.mxu0 %v179
    %v274 = vpop.f32.mrf.mxu0
    %v275 = vadd.f32 %v201, %v274
    %v276 = vpop.f32.mrf.mxu0
    %277 = vdwg.mxu0
    %278 = vst [vmem:[#allocation8] sm:$0xff] %v270
    %279 = vst [vmem:[#allocation8 + $0x8] sm:$0xff] %v275
    // Predicated region
    $region34: #{tpu_custom_call.1} parent=1 // pred_check
      _
    $region35: #{tpu_custom_call.1} parent=1 // pred_check_branch
      %281 = sbr.rel (0) target = $region37
    $region36: #{tpu_custom_call.1} parent=1 // pred_region
      %s283 = ssub.s32 256, 256
      %284 = vsyncadd [#allocation4], %s283
      %s285 = sshll.u32 [#allocation8], 4
      %s286 = int_to_ptr.vmem [resolvable:$true] %s285
      %291 = dma.vmem_to_hbm [thread:$0]  %s286, 256, %s5, [#allocation4], 128, 128, 8
    $region37: #{tpu_custom_call.1} parent=1 // pred_fallthru
      _
    // Predicated region
    $region38: #{tpu_custom_call.1} parent=1 // pred_check
      _
    $region39: #{tpu_custom_call.1} parent=1 // pred_check_branch
      %293 = sbr.rel (0) target = $region41
    $region40: #{tpu_custom_call.1} parent=1 // pred_region
      %294 = dma.done [#allocation4], 256
    $region41: #{tpu_custom_call.1} parent=1 // pred_fallthru
      _
    %295 = vsyncpa [#allocation3], 1
    %296 = vsyncpa [#allocation6], 1
    %297 = vsyncpa [#allocation4], 1

</llo_original>
